<compile_context>
chip_gen: v5e
topology: v5e:2x2
jax: 0.10.0
libtpu: 0.0.40
codegen_flags: <defaults>
</compile_context>

<pallas_src>
import jax
import jax.numpy as jnp
from jax.experimental import pallas as pl
from jax.experimental.pallas import tpu as pltpu

LANE = 128       # vreg lane width
SUBLANE = 8      # vreg sublane count (f32)

_VMEM_BUDGET_BYTES = 24 * 1024 * 1024   # per-step working-set budget (safe on v5e/v6e/v7x)
_VMEM_LIMIT_BYTES = 32 * 1024 * 1024    # raise v5e's 16 MiB scoped default; == default elsewhere
_MIN_MEGACORE_SPLIT = 2048              # split a single large tile across the 2 TCs above this


def _round_up(n, m):
    return ((n + m - 1) // m) * m


def mlp_kernel(x_ref, w1_ref, b1_ref, w2_ref, b2_ref, w3_ref, b3_ref, o_ref):
    # fc1 + ReLU: MXU matmul in the weight dtype (x pre-cast in the wrapper),
    # f32 accumulation, f32 elementwise epilogue (v5e VPU has no bf16).
    h1 = jnp.dot(x_ref[...], w1_ref[...], preferred_element_type=jnp.float32)
    h1 = jnp.maximum(h1 + b1_ref[...].astype(jnp.float32), 0.0)

    # dropout2: eval/inference mode -> identity.
    # TODO(synk): training-mode dropout not implemented.

    # fc2 + ReLU
    h2 = jnp.dot(h1.astype(w2_ref.dtype), w2_ref[...],
                 preferred_element_type=jnp.float32)
    h2 = jnp.maximum(h2 + b2_ref[...].astype(jnp.float32), 0.0)

    # fc3 logits: stored narrow (num_classes lanes == full array dim).  The
    # kernel is writeback-bound, so 10 useful lanes beat an unmasked padded
    # 128-lane store (12.8x fewer output HBM bytes, no extra slice pass).
    out = jnp.dot(h2.astype(w3_ref.dtype), w3_ref[...],
                  preferred_element_type=jnp.float32)
    o_ref[...] = (out + b3_ref[...].astype(jnp.float32)).astype(o_ref.dtype)


def neural_net_forward(x, params, *, block_b=4096, out_dtype=None):
    """x: [B, input_size]. params: dict of [in, out] weights and [1, out] biases.

    Weights may be float32 or bfloat16; accumulation is always float32.
    `out_dtype` defaults to the (original) input dtype; pass jnp.bfloat16 to
    halve logits writeback.
    """
    w1, b1 = params["w1"], params["b1"]
    w2, b2 = params["w2"], params["b2"]
    w3, b3 = params["w3"], params["b3"]

    B, F = x.shape
    H1, H2, C = w1.shape[1], w2.shape[1], w3.shape[1]

    out_dtype = jnp.dtype(x.dtype if out_dtype is None else out_dtype)

    # bf16-weight path: quantize x in the wrapper (kernel did it before fc1
    # anyway) -> halves x HBM read and the x VMEM block.
    if x.dtype != w1.dtype:
        x = x.astype(w1.dtype)

    # Tile unit: 8 sublanes for 32-bit, 16 for 16-bit, 32 for 8-bit x.
    unit = max(SUBLANE, 32 // jnp.dtype(x.dtype).itemsize)

    # Pad batch only to the tile unit (NOT to a full TB multiple); the ragged
    # last grid tile is handled by Pallas (OOB writes discarded).
    B_pad = _round_up(B, unit)
    if B_pad != B:
        x = jnp.pad(x, ((0, B_pad - B), (0, 0)))

    # --- batch tile selection (VMEM-aware) ---
    nbytes = lambda a: a.size * a.dtype.itemsize
    weight_vmem = 2 * (nbytes(w1) + nbytes(b1) + nbytes(w2) + nbytes(b2)
                       + nbytes(w3) + nbytes(b3))
    per_row = (2 * F * x.dtype.itemsize          # double-buffered x block
               + 2 * C * out_dtype.itemsize      # double-buffered out block
               + (H1 + H2 + C) * 4)              # f32 intermediates h1/h2/out
    vmem_cap = max(unit, (_VMEM_BUDGET_BYTES - weight_vmem) // per_row)

    TB = min(block_b, B_pad, vmem_cap)
    TB = max(unit, (TB // unit) * unit)

    # Megacore: if the whole (large) batch fits one tile, split in two so both
    # TensorCores get a tile via the "parallel" grid axis.
    if B_pad >= _MIN_MEGACORE_SPLIT and B_pad <= TB:
        TB = _round_up(pl.cdiv(B_pad, 2), unit)

    grid = (pl.cdiv(B_pad, TB),)

    def full(arr):  # whole-array block, resident across all grid steps
        nd = arr.ndim
        return pl.BlockSpec(arr.shape, lambda i, _nd=nd: (0,) * _nd)

    flops = 2 * B_pad * (F * H1 + H1 * H2 + H2 * C)
    bytes_accessed = (nbytes(x) + weight_vmem // 2
                      + B_pad * C * out_dtype.itemsize)
    cost = pl.CostEstimate(flops=flops, transcendentals=0,
                           bytes_accessed=bytes_accessed)

    out = pl.pallas_call(
        mlp_kernel,
        out_shape=jax.ShapeDtypeStruct((B_pad, C), out_dtype),
        grid=grid,
        in_specs=[
            pl.BlockSpec((TB, F), lambda i: (i, 0)),   # x: batch-tiled
            full(w1), full(b1),
            full(w2), full(b2),
            full(w3), full(b3),
        ],
        out_specs=pl.BlockSpec((TB, C), lambda i: (i, 0)),
        compiler_params=pltpu.CompilerParams(
            dimension_semantics=("parallel",),          # shard batch across TCs
            vmem_limit_bytes=_VMEM_LIMIT_BYTES),
        cost_estimate=cost,
    )(x, w1, b1, w2, b2, w3, b3)

    return out if B_pad == B else out[:B]


def init_params(key, input_size, hidden_size_list, num_classes, dtype=jnp.float32):
    """Deterministic init mimicking nn.Linear (uniform +-1/sqrt(fan_in)).
    Weights stored as [in, out] (transposed vs. PyTorch's [out, in])."""
    dims = [input_size, hidden_size_list[0], hidden_size_list[1], num_classes]
    params = {}
    for i in range(3):
        fan_in, fan_out = dims[i], dims[i + 1]
        key, kw, kb = jax.random.split(key, 3)
        bound = 1.0 / (fan_in ** 0.5)
        params[f"w{i+1}"] = jax.random.uniform(
            kw, (fan_in, fan_out), dtype, minval=-bound, maxval=bound)
        # bias kept 2D [1, out] for TPU-friendly layout; broadcasts over batch
        params[f"b{i+1}"] = jax.random.uniform(
            kb, (1, fan_out), dtype, minval=-bound, maxval=bound)
    return params


def ref_forward(x, params):
    """Pure-JAX reference in the same mixed precision as the kernel."""
    w_dt = params["w1"].dtype
    h1 = jnp.dot(x.astype(w_dt), params["w1"],
                 preferred_element_type=jnp.float32)
    h1 = jnp.maximum(h1 + params["b1"].astype(jnp.float32), 0.0)
    h2 = jnp.dot(h1.astype(w_dt), params["w2"],
                 preferred_element_type=jnp.float32)
    h2 = jnp.maximum(h2 + params["b2"].astype(jnp.float32), 0.0)
    out = jnp.dot(h2.astype(w_dt), params["w3"],
                  preferred_element_type=jnp.float32)
    return out + params["b3"].astype(jnp.float32)


if __name__ == "__main__":
    # Small shapes consistent with the module's forward.
    batch = 8
    input_size = 32
    hidden_size_list = [64, 32]
    num_classes = 10

    key = jax.random.PRNGKey(0)
    key, kx = jax.random.split(key)
    x = jax.random.normal(kx, (batch, input_size), dtype=jnp.float32)
    params = init_params(key, input_size, hidden_size_list, num_classes)

    # float32 path (tight check)
    out = neural_net_forward(x, params)
    jax.block_until_ready(out)
    ref = ref_forward(x, params)
    assert out.shape == (batch, num_classes)
    assert jnp.allclose(out, ref, atol=1e-5, rtol=1e-5)

    # bf16-weight mixed-precision path (v6e/v7x MXU), f32 accumulation.
    params_bf16 = {k: v.astype(jnp.bfloat16) for k, v in params.items()}
    out_bf16 = neural_net_forward(x, params_bf16)
    jax.block_until_ready(out_bf16)
    ref_bf16 = ref_forward(x, params_bf16)
    assert out_bf16.shape == (batch, num_classes)
    assert jnp.allclose(out_bf16.astype(jnp.float32),
                        ref_bf16.astype(jnp.float32), atol=1e-2, rtol=1e-2)

    # Multi-tile grid with a ragged last tile (B not a multiple of TB).
    key, kx2 = jax.random.split(key)
    x2 = jax.random.normal(kx2, (200, input_size), dtype=jnp.float32)
    out2 = neural_net_forward(x2, params, block_b=64)
    jax.block_until_ready(out2)
    ref2 = ref_forward(x2, params)
    assert out2.shape == (200, num_classes)
    assert jnp.allclose(out2, ref2, atol=1e-5, rtol=1e-5)

    print("KERNEL_OK")
</pallas_src>

<mosaic_0001>
module attributes {stable_mosaic.version = 11 : i64} {
  func.func @mlp_kernel(%arg0: i32, %arg1: memref<8x32xf32, #tpu.memory_space<vmem>>, %arg2: memref<32x64xf32, #tpu.memory_space<vmem>>, %arg3: memref<1x64xf32, #tpu.memory_space<vmem>>, %arg4: memref<64x32xf32, #tpu.memory_space<vmem>>, %arg5: memref<1x32xf32, #tpu.memory_space<vmem>>, %arg6: memref<32x10xf32, #tpu.memory_space<vmem>>, %arg7: memref<1x10xf32, #tpu.memory_space<vmem>>, %arg8: memref<8x10xf32, #tpu.memory_space<vmem>>) attributes {dimension_semantics = [#tpu.dimension_semantics<parallel>], iteration_bounds = array<i64: 1>, scalar_prefetch = 0 : i64, scratch_operands = 0 : i64, tpu.core_type = #tpu.core_type<tc>, window_params = [{transform_indices = @transform_0, window_bounds = array<i64: 8, 32>}, {pipeline_mode = #tpu.pipeline_mode<synchronous>, transform_indices = @transform_1, window_bounds = array<i64: 32, 64>}, {pipeline_mode = #tpu.pipeline_mode<synchronous>, transform_indices = @transform_2, window_bounds = array<i64: 1, 64>}, {pipeline_mode = #tpu.pipeline_mode<synchronous>, transform_indices = @transform_3, window_bounds = array<i64: 64, 32>}, {pipeline_mode = #tpu.pipeline_mode<synchronous>, transform_indices = @transform_4, window_bounds = array<i64: 1, 32>}, {pipeline_mode = #tpu.pipeline_mode<synchronous>, transform_indices = @transform_5, window_bounds = array<i64: 32, 10>}, {pipeline_mode = #tpu.pipeline_mode<synchronous>, transform_indices = @transform_6, window_bounds = array<i64: 1, 10>}, {transform_indices = @transform_7, window_bounds = array<i64: 8, 10>}]} {
    %c0 = arith.constant 0 : index
    %c0_0 = arith.constant 0 : index
    %0 = vector.load %arg1[%c0, %c0_0] : memref<8x32xf32, #tpu.memory_space<vmem>>, vector<8x32xf32>
    %c0_1 = arith.constant 0 : index
    %c0_2 = arith.constant 0 : index
    %1 = vector.load %arg2[%c0_1, %c0_2] : memref<32x64xf32, #tpu.memory_space<vmem>>, vector<32x64xf32>
    %cst = arith.constant dense<0.000000e+00> : vector<8x64xf32>
    %2 = tpu.matmul %0, %1, %cst {dimension_numbers = #tpu.dot_dimension_numbers<[1], [0], [0], [1], [0, 0, 1, 1], [], []>} : vector<8x32xf32>, vector<32x64xf32>, vector<8x64xf32> -> vector<8x64xf32>
    %c0_3 = arith.constant 0 : index
    %c0_4 = arith.constant 0 : index
    %3 = vector.load %arg3[%c0_3, %c0_4] : memref<1x64xf32, #tpu.memory_space<vmem>>, vector<1x64xf32>
    %4 = vector.broadcast %3 : vector<1x64xf32> to vector<8x64xf32>
    %5 = arith.addf %2, %4 : vector<8x64xf32>
    %cst_5 = arith.constant 0.000000e+00 : f32
    %6 = vector.broadcast %cst_5 : f32 to vector<8x64xf32>
    %7 = arith.maximumf %5, %6 : vector<8x64xf32>
    %c0_6 = arith.constant 0 : index
    %c0_7 = arith.constant 0 : index
    %8 = vector.load %arg4[%c0_6, %c0_7] : memref<64x32xf32, #tpu.memory_space<vmem>>, vector<64x32xf32>
    %cst_8 = arith.constant dense<0.000000e+00> : vector<8x32xf32>
    %9 = tpu.matmul %7, %8, %cst_8 {dimension_numbers = #tpu.dot_dimension_numbers<[1], [0], [0], [1], [0, 0, 1, 1], [], []>} : vector<8x64xf32>, vector<64x32xf32>, vector<8x32xf32> -> vector<8x32xf32>
    %c0_9 = arith.constant 0 : index
    %c0_10 = arith.constant 0 : index
    %10 = vector.load %arg5[%c0_9, %c0_10] : memref<1x32xf32, #tpu.memory_space<vmem>>, vector<1x32xf32>
    %11 = vector.broadcast %10 : vector<1x32xf32> to vector<8x32xf32>
    %12 = arith.addf %9, %11 : vector<8x32xf32>
    %cst_11 = arith.constant 0.000000e+00 : f32
    %13 = vector.broadcast %cst_11 : f32 to vector<8x32xf32>
    %14 = arith.maximumf %12, %13 : vector<8x32xf32>
    %c0_12 = arith.constant 0 : index
    %c0_13 = arith.constant 0 : index
    %15 = vector.load %arg6[%c0_12, %c0_13] : memref<32x10xf32, #tpu.memory_space<vmem>>, vector<32x10xf32>
    %cst_14 = arith.constant dense<0.000000e+00> : vector<8x10xf32>
    %16 = tpu.matmul %14, %15, %cst_14 {dimension_numbers = #tpu.dot_dimension_numbers<[1], [0], [0], [1], [0, 0, 1, 1], [], []>} : vector<8x32xf32>, vector<32x10xf32>, vector<8x10xf32> -> vector<8x10xf32>
    %c0_15 = arith.constant 0 : index
    %c0_16 = arith.constant 0 : index
    %17 = vector.load %arg7[%c0_15, %c0_16] : memref<1x10xf32, #tpu.memory_space<vmem>>, vector<1x10xf32>
    %18 = vector.broadcast %17 : vector<1x10xf32> to vector<8x10xf32>
    %19 = arith.addf %16, %18 : vector<8x10xf32>
    %c0_17 = arith.constant 0 : index
    %c0_18 = arith.constant 0 : index
    %20 = vector.load %arg8[%c0_17, %c0_18] : memref<8x10xf32, #tpu.memory_space<vmem>>, vector<8x10xf32>
    tpu.vector_store %arg8[%c0_17, %c0_18], %19 {strides = array<i32>} : memref<8x10xf32, #tpu.memory_space<vmem>>, vector<8x10xf32>,
    return
  }
  func.func @transform_0(%arg0: i32) -> (i32, i32) {
    %c0_i32 = arith.constant 0 : i32
    %c0_i32_0 = arith.constant 0 : i32
    return %arg0, %c0_i32 : i32, i32
  }
  func.func @transform_1(%arg0: i32) -> (i32, i32) {
    %c0_i32 = arith.constant 0 : i32
    %c0_i32_0 = arith.constant 0 : i32
    %c0_i32_1 = arith.constant 0 : i32
    return %c0_i32, %c0_i32_0 : i32, i32
  }
  func.func @transform_2(%arg0: i32) -> (i32, i32) {
    %c0_i32 = arith.constant 0 : i32
    %c0_i32_0 = arith.constant 0 : i32
    %c0_i32_1 = arith.constant 0 : i32
    return %c0_i32, %c0_i32_0 : i32, i32
  }
  func.func @transform_3(%arg0: i32) -> (i32, i32) {
    %c0_i32 = arith.constant 0 : i32
    %c0_i32_0 = arith.constant 0 : i32
    %c0_i32_1 = arith.constant 0 : i32
    return %c0_i32, %c0_i32_0 : i32, i32
  }
  func.func @transform_4(%arg0: i32) -> (i32, i32) {
    %c0_i32 = arith.constant 0 : i32
    %c0_i32_0 = arith.constant 0 : i32
    %c0_i32_1 = arith.constant 0 : i32
    return %c0_i32, %c0_i32_0 : i32, i32
  }
  func.func @transform_5(%arg0: i32) -> (i32, i32) {
    %c0_i32 = arith.constant 0 : i32
    %c0_i32_0 = arith.constant 0 : i32
    %c0_i32_1 = arith.constant 0 : i32
    return %c0_i32, %c0_i32_0 : i32, i32
  }
  func.func @transform_6(%arg0: i32) -> (i32, i32) {
    %c0_i32 = arith.constant 0 : i32
    %c0_i32_0 = arith.constant 0 : i32
    %c0_i32_1 = arith.constant 0 : i32
    return %c0_i32, %c0_i32_0 : i32, i32
  }
  func.func @transform_7(%arg0: i32) -> (i32, i32) {
    %c0_i32 = arith.constant 0 : i32
    %c0_i32_0 = arith.constant 0 : i32
    return %arg0, %c0_i32 : i32, i32
  }
}

</mosaic_0001>

<llo_original>
// kernel: tpu_custom_call.1
$region0: #{tpu_custom_call.1}
  #allocation0 [shape = 'u32[]', space=smem, size = 0x4, offset = 0x4, fixed_abs, tag = 'smem constant byte address 0x4 - core index']
  #allocation1 [shape = 'u32[72,128]{1,0:T(1,128)}', space=vmem, size = 0x9000, scoped, tag = 'internal scratch']
  %s0 = inlined_call_operand.vmem [shape: f32[8,32], index: 0, kind: input, shape index: {}]
  %s1 = inlined_call_operand.vmem [shape: f32[32,64], index: 1, kind: input, shape index: {}]
  %s2 = inlined_call_operand.vmem [shape: f32[1,64], index: 2, kind: input, shape index: {}]
  %s3 = inlined_call_operand.vmem [shape: f32[64,32], index: 3, kind: input, shape index: {}]
  %s4 = inlined_call_operand.vmem [shape: f32[1,32], index: 4, kind: input, shape index: {}]
  %s5 = inlined_call_operand.vmem [shape: f32[32,10], index: 5, kind: input, shape index: {}]
  %s6 = inlined_call_operand.vmem [shape: f32[1,10], index: 6, kind: input, shape index: {}]
  %s7 = inlined_call_operand.hbm [shape: f32[8,10], index: 7, kind: output, shape index: {}]
  %s8 = sld [smem:[#allocation0]]
  $region38: #{tpu_custom_call.1} parent=0
    _
  %s10 = ssub.s32 1, %s8
  %s11 = scalar_select 0, %s10, %s8
  $region1: #{tpu_custom_call.1} parent=0
    #allocation2 [shape = 'u8[4096]{0}', space=vmem, size = 0x1000, scoped, tag = 'output window, operand 0, single buffered']
    #allocation3 [shape = 's32[1]{0}', space=sflag, size = 0x4, scoped, tag = 'scoped memory for tpu_custom_call.1']
    %12 = vsyncpa [#allocation3], 0
    // Predicated region
    $region2: #{tpu_custom_call.1} parent=1 // pred_check
      _
    $region3: #{tpu_custom_call.1} parent=1 // pred_check_branch
      %14 = sbr.rel (0) target = $region5
    $region4: #{tpu_custom_call.1} parent=1 // pred_region
      _
    $region5: #{tpu_custom_call.1} parent=1 // pred_fallthru
      _
    // Predicated region
    $region6: #{tpu_custom_call.1} parent=1 // pred_check
      _
    $region7: #{tpu_custom_call.1} parent=1 // pred_check_branch
      %16 = sbr.rel (0) target = $region9
    $region8: #{tpu_custom_call.1} parent=1 // pred_region
      _
    $region9: #{tpu_custom_call.1} parent=1 // pred_fallthru
      _
    // Predicated region
    $region10: #{tpu_custom_call.1} parent=1 // pred_check
      _
    $region11: #{tpu_custom_call.1} parent=1 // pred_check_branch
      %18 = sbr.rel (0) target = $region13
    $region12: #{tpu_custom_call.1} parent=1 // pred_region
      _
    $region13: #{tpu_custom_call.1} parent=1 // pred_fallthru
      _
    // Predicated region
    $region14: #{tpu_custom_call.1} parent=1 // pred_check
      _
    $region15: #{tpu_custom_call.1} parent=1 // pred_check_branch
      %20 = sbr.rel (0) target = $region17
    $region16: #{tpu_custom_call.1} parent=1 // pred_region
      _
    $region17: #{tpu_custom_call.1} parent=1 // pred_fallthru
      _
    // Predicated region
    $region18: #{tpu_custom_call.1} parent=1 // pred_check
      _
    $region19: #{tpu_custom_call.1} parent=1 // pred_check_branch
      %22 = sbr.rel (0) target = $region21
    $region20: #{tpu_custom_call.1} parent=1 // pred_region
      _
    $region21: #{tpu_custom_call.1} parent=1 // pred_fallthru
      _
    // Predicated region
    $region22: #{tpu_custom_call.1} parent=1 // pred_check
      _
    $region23: #{tpu_custom_call.1} parent=1 // pred_check_branch
      %24 = sbr.rel (0) target = $region25
    $region24: #{tpu_custom_call.1} parent=1 // pred_region
      _
    $region25: #{tpu_custom_call.1} parent=1 // pred_fallthru
      _
    // Predicated region
    $region26: #{tpu_custom_call.1} parent=1 // pred_check
      _
    $region27: #{tpu_custom_call.1} parent=1 // pred_check_branch
      %26 = sbr.rel (0) target = $region29
    $region28: #{tpu_custom_call.1} parent=1 // pred_region
      _
    $region29: #{tpu_custom_call.1} parent=1 // pred_fallthru
      _
    %v27 = vld [vmem:[%s0] sm:$0xff]
    %v28 = vld [vmem:[%s1] sm:$0xff]
    %v29 = vld [vmem:[%s1 + $0x8] sm:$0xff]
    %v30 = vld [vmem:[%s1 + $0x10] sm:$0xff]
    %v31 = vld [vmem:[%s1 + $0x18] sm:$0xff]
    %v32 = vld [vmem:[%s2] sm:$0x1]
    %v34 = vperm.slane %v32, 0
    %vm36 = vcmask 261120
    %v38 = vsel %vm36, %v27, 0
    %40 = vmatpush.msra.mxu0 0.0
    %41 = vmatpush.msra.mxu0 0.0
    %42 = vmatpush.msra.mxu0 0.0
    %43 = vmatpush.msra.mxu0 0.0
    %44 = vmatpush.msra.mxu0 0.0
    %45 = vmatpush.msra.mxu0 0.0
    %46 = vmatpush.msra.mxu0 0.0
    %47 = vmatpush.msra.mxu0 0.0
    %48 = vmatpush.msra.mxu0 0.0
    %49 = vmatpush.msra.mxu0 0.0
    %50 = vmatpush.msra.mxu0 0.0
    %51 = vmatpush.msra.mxu0 0.0
    %52 = vmatpush.msra.mxu0 %v31
    %53 = vmatpush.msra.mxu0 %v30
    %54 = vmatpush.msra.mxu0 %v29
    %55 = vmatpush.msra.mxu0 %v28
    %56 = vmatmul.f32.gmra.mxu0 %v38
    %v57 = vpop.f32.mrf.mxu0
    %v58 = vadd.f32 %v34, %v57
    %59 = vdwg.mxu0
    %v60 = vmax.f32 %v58, 0.0
    %v61 = vld [vmem:[%s3] sm:$0xff]
    %v62 = vld [vmem:[%s3 + $0x8] sm:$0xff]
    %v63 = vld [vmem:[%s3 + $0x10] sm:$0xff]
    %v64 = vld [vmem:[%s3 + $0x18] sm:$0xff]
    %v65 = vld [vmem:[%s3 + $0x20] sm:$0xff]
    %v66 = vld [vmem:[%s3 + $0x28] sm:$0xff]
    %v67 = vld [vmem:[%s3 + $0x30] sm:$0xff]
    %v68 = vld [vmem:[%s3 + $0x38] sm:$0xff]
    %v69 = vld [vmem:[%s4] sm:$0x1]
    %v71 = vperm.slane %v69, 0
    %vm73 = vcmask 523264
    %v75 = vsel %vm73, %v60, 0
    %77 = vmatpush.msra.mxu0 0.0
    %78 = vmatpush.msra.mxu0 0.0
    %79 = vmatpush.msra.mxu0 0.0
    %80 = vmatpush.msra.mxu0 0.0
    %81 = vmatpush.msra.mxu0 0.0
    %82 = vmatpush.msra.mxu0 0.0
    %83 = vmatpush.msra.mxu0 0.0
    %84 = vmatpush.msra.mxu0 0.0
    %85 = vmatpush.msra.mxu0 %v68
    %86 = vmatpush.msra.mxu0 %v67
    %87 = vmatpush.msra.mxu0 %v66
    %88 = vmatpush.msra.mxu0 %v65
    %89 = vmatpush.msra.mxu0 %v64
    %90 = vmatpush.msra.mxu0 %v63
    %91 = vmatpush.msra.mxu0 %v62
    %92 = vmatpush.msra.mxu0 %v61
    %93 = vmatmul.f32.gmra.mxu0 %v75
    %v94 = vpop.f32.mrf.mxu0
    %v95 = vadd.f32 %v71, %v94
    %96 = vdwg.mxu0
    %v97 = vmax.f32 %v95, 0.0
    %v98 = vld [vmem:[%s5] sm:$0xff]
    %v99 = vld [vmem:[%s5 + $0x8] sm:$0xff]
    %v100 = vld [vmem:[%s5 + $0x10] sm:$0xff]
    %v101 = vld [vmem:[%s5 + $0x18] sm:$0xff]
    %v102 = vld [vmem:[%s6] sm:$0x1]
    %v104 = vperm.slane %v102, 0
    %v107 = vsel %vm36, %v97, 0
    %109 = vmatpush.msra.mxu0 0.0
    %110 = vmatpush.msra.mxu0 0.0
    %111 = vmatpush.msra.mxu0 0.0
    %112 = vmatpush.msra.mxu0 0.0
    %113 = vmatpush.msra.mxu0 0.0
    %114 = vmatpush.msra.mxu0 0.0
    %115 = vmatpush.msra.mxu0 0.0
    %116 = vmatpush.msra.mxu0 0.0
    %117 = vmatpush.msra.mxu0 0.0
    %118 = vmatpush.msra.mxu0 0.0
    %119 = vmatpush.msra.mxu0 0.0
    %120 = vmatpush.msra.mxu0 0.0
    %121 = vmatpush.msra.mxu0 %v101
    %122 = vmatpush.msra.mxu0 %v100
    %123 = vmatpush.msra.mxu0 %v99
    %124 = vmatpush.msra.mxu0 %v98
    %125 = vmatmul.f32.gmra.mxu0 %v107
    %v126 = vpop.f32.mrf.mxu0
    %v127 = vadd.f32 %v104, %v126
    %128 = vdwg.mxu0
    %vm129 = vcmask 80896
    %130 = vst.msk [vmem:[#allocation2] sm:$0xff] %vm129, %v127
    // Predicated region
    $region30: #{tpu_custom_call.1} parent=1 // pred_check
      _
    $region31: #{tpu_custom_call.1} parent=1 // pred_check_branch
      %132 = sbr.rel (0) target = $region33
    $region32: #{tpu_custom_call.1} parent=1 // pred_region
      %134 = vsyncadd [#allocation3], 0
      %s136 = sshll.u32 [#allocation2], 4
      %s137 = int_to_ptr.vmem [resolvable:$true] %s136
      %s138 = sshll.u32 %s7, 4
      %s139 = int_to_ptr.hbm [resolvable:$true] %s138
      %141 = dma.vmem_to_hbm [thread:$0]  %s137, 128, %s139, [#allocation3]
    $region33: #{tpu_custom_call.1} parent=1 // pred_fallthru
      _
    // Predicated region
    $region34: #{tpu_custom_call.1} parent=1 // pred_check
      _
    $region35: #{tpu_custom_call.1} parent=1 // pred_check_branch
      %143 = sbr.rel (0) target = $region37
    $region36: #{tpu_custom_call.1} parent=1 // pred_region
      %145 = dma.done [#allocation3], 128
    $region37: #{tpu_custom_call.1} parent=1 // pred_fallthru
      _
    %146 = vsyncpa [#allocation3], 1

</llo_original>
